<compile_context>
chip_gen: v6e
topology: v6e:2x2x1
jax: 0.10.0
libtpu: 0.0.40
codegen_flags: <defaults>
</compile_context>

<pallas_src>
import functools
import math

import jax
import jax.numpy as jnp
from jax.experimental import pallas as pl
from jax.experimental.pallas import tpu as pltpu


def _sparse_attn_kernel(h_ref, bits_ref,
                        wq_ref, wk_ref, wv_ref,
                        bq_ref, bk_ref, bv_ref,
                        o_ref,
                        *, threshold: int):
    """One grid step processes a (Bb, S, E) slab of batch elements."""
    Bb, S, E = h_ref.shape

    # --- QKV projections: one big (Bb*S, E) x (E, E) matmul each (MXU). ---
    h2 = h_ref[...].reshape(Bb * S, E)
    q = (jnp.dot(h2, wq_ref[...], preferred_element_type=jnp.float32)
         + bq_ref[...]).reshape(Bb, S, E)
    k = (jnp.dot(h2, wk_ref[...], preferred_element_type=jnp.float32)
         + bk_ref[...]).reshape(Bb, S, E)
    v = (jnp.dot(h2, wv_ref[...], preferred_element_type=jnp.float32)
         + bv_ref[...]).reshape(Bb, S, E)

    # --- Scores: batched contraction over E (no explicit k transpose). ---
    inv_scale = jnp.float32(1.0 / math.sqrt(E))
    scores = jnp.einsum('bqd,bkd->bqk', q, k,
                        preferred_element_type=jnp.float32) * inv_scale

    # --- Random sparsity mask, integer-domain compare:  P(bits < thr) = sparsity.
    mask = bits_ref[...] < jnp.uint32(threshold)
    scores = jnp.where(mask, -jnp.inf, scores)

    # --- Softmax along the last axis (same numerics as torch Softmax(dim=-1)).
    m = jnp.max(scores, axis=-1, keepdims=True)
    p = jnp.exp(scores - m)
    l = jnp.sum(p, axis=-1, keepdims=True)
    probs = p / l   # NOTE: a fully-masked row yields NaN, same as the reference.

    # --- Context layer. ---
    o_ref[...] = jnp.einsum('bqk,bkd->bqd', probs, v,
                            preferred_element_type=jnp.float32)


def sparse_flex_attention(hidden_states, wq, bq, wk, bk, wv, bv, mask_key,
                          sparsity=0.1, block_b=None):
    """hidden_states: (B, S, E) f32; wX: (E, E) pre-transposed; bX: (1, E).

    mask_key: jax PRNG key used to draw the random sparsity mask (one draw per
    forward call, matching torch.rand(...) < sparsity semantics; bit values
    differ from torch, distribution is the same).
    """
    B, S, E = hidden_states.shape

    # Batch elements per grid step (amortize per-step overhead, fill MXU).
    if block_b is None:
        if B <= 8:
            block_b = B
        else:
            block_b = next(d for d in (8, 4, 2, 1) if B % d == 0)
    assert B % block_b == 0, "block_b must divide B"
    grid = (B // block_b,)

    # Random bits for the sparsity mask, drawn outside the kernel (the TPU
    # stateful PRNG primitives have no interpret/CPU lowering).
    bits = jax.random.bits(mask_key, (B, S, S), dtype=jnp.uint32)
    # uint32 threshold such that P(bits < threshold) == sparsity.
    threshold = min(max(int(float(sparsity) * 4294967296.0), 0), 4294967295)

    kernel = functools.partial(_sparse_attn_kernel, threshold=threshold)

    return pl.pallas_call(
        kernel,
        grid=grid,
        in_specs=[
            pl.BlockSpec((block_b, S, E), lambda b: (b, 0, 0)),  # hidden
            pl.BlockSpec((block_b, S, S), lambda b: (b, 0, 0)),  # mask bits
            pl.BlockSpec((E, E), lambda b: (0, 0)),              # Wq
            pl.BlockSpec((E, E), lambda b: (0, 0)),              # Wk
            pl.BlockSpec((E, E), lambda b: (0, 0)),              # Wv
            pl.BlockSpec((1, E), lambda b: (0, 0)),              # bq
            pl.BlockSpec((1, E), lambda b: (0, 0)),              # bk
            pl.BlockSpec((1, E), lambda b: (0, 0)),              # bv
        ],
        out_specs=pl.BlockSpec((block_b, S, E), lambda b: (b, 0, 0)),
        out_shape=jax.ShapeDtypeStruct((B, S, E), jnp.float32),
        compiler_params=pltpu.CompilerParams(
            dimension_semantics=("parallel",),      # stateless kernel -> megacore OK
            vmem_limit_bytes=64 * 1024 * 1024,
        ),
    )(hidden_states, bits, wq, wk, wv, bq, bk, bv)


def _reference(hidden, wq, bq, wk, bk, wv, bv, bits, sparsity):
    """Pure-JAX reference with the same random bits (for a sanity check)."""
    hp = 'highest'
    q = jnp.einsum('bse,ef->bsf', hidden, wq, precision=hp) + bq
    k = jnp.einsum('bse,ef->bsf', hidden, wk, precision=hp) + bk
    v = jnp.einsum('bse,ef->bsf', hidden, wv, precision=hp) + bv
    E = hidden.shape[-1]
    scores = jnp.einsum('bqd,bkd->bqk', q, k, precision=hp) / jnp.sqrt(
        jnp.float32(E))
    threshold = min(max(int(float(sparsity) * 4294967296.0), 0), 4294967295)
    scores = jnp.where(bits < jnp.uint32(threshold), -jnp.inf, scores)
    probs = jax.nn.softmax(scores, axis=-1)
    return jnp.einsum('bqk,bkd->bqd', probs, v, precision=hp)


if __name__ == "__main__":
    # Small config consistent with the module: batch=2, seq=8, n_embd=32.
    B, S, E = 2, 8, 32
    sparsity = 0.1

    key = jax.random.PRNGKey(0)
    k_h, k_wq, k_wk, k_wv, k_bq, k_bk, k_bv, k_mask = jax.random.split(key, 8)

    hidden = jax.random.normal(k_h, (B, S, E), dtype=jnp.float32)

    # Deterministic synthetic parameters (stored as (in, out), i.e. W.T of torch).
    wq = 0.02 * jax.random.normal(k_wq, (E, E), dtype=jnp.float32)
    wk = 0.02 * jax.random.normal(k_wk, (E, E), dtype=jnp.float32)
    wv = 0.02 * jax.random.normal(k_wv, (E, E), dtype=jnp.float32)
    bq = 0.01 * jax.random.normal(k_bq, (1, E), dtype=jnp.float32)
    bk = 0.01 * jax.random.normal(k_bk, (1, E), dtype=jnp.float32)
    bv = 0.01 * jax.random.normal(k_bv, (1, E), dtype=jnp.float32)

    out = sparse_flex_attention(hidden, wq, bq, wk, bk, wv, bv, k_mask,
                                sparsity=sparsity)
    out = jax.block_until_ready(out)
    assert out.shape == (B, S, E) and out.dtype == jnp.float32

    # Sanity check against a pure-JAX reference using the same mask bits.
    bits = jax.random.bits(k_mask, (B, S, S), dtype=jnp.uint32)
    ref = _reference(hidden, wq, bq, wk, bk, wv, bv, bits, sparsity)
    assert jnp.allclose(out, ref, rtol=1e-2, atol=1e-4), "mismatch vs reference"

    print("KERNEL_OK")
</pallas_src>

<mosaic_0001>
module attributes {stable_mosaic.version = 11 : i64} {
  func.func @_sparse_attn_kernel(%arg0: i32, %arg1: memref<2x8x32xf32, #tpu.memory_space<vmem>>, %arg2: memref<2x8x8xi32, #tpu.memory_space<vmem>>, %arg3: memref<32x32xf32, #tpu.memory_space<vmem>>, %arg4: memref<32x32xf32, #tpu.memory_space<vmem>>, %arg5: memref<32x32xf32, #tpu.memory_space<vmem>>, %arg6: memref<1x32xf32, #tpu.memory_space<vmem>>, %arg7: memref<1x32xf32, #tpu.memory_space<vmem>>, %arg8: memref<1x32xf32, #tpu.memory_space<vmem>>, %arg9: memref<2x8x32xf32, #tpu.memory_space<vmem>>) attributes {dimension_semantics = [#tpu.dimension_semantics<parallel>], iteration_bounds = array<i64: 1>, scalar_prefetch = 0 : i64, scratch_operands = 0 : i64, tpu.core_type = #tpu.core_type<tc>, window_params = [{transform_indices = @transform_0, window_bounds = array<i64: 2, 8, 32>}, {transform_indices = @transform_1, window_bounds = array<i64: 2, 8, 8>}, {pipeline_mode = #tpu.pipeline_mode<synchronous>, transform_indices = @transform_2, window_bounds = array<i64: 32, 32>}, {pipeline_mode = #tpu.pipeline_mode<synchronous>, transform_indices = @transform_3, window_bounds = array<i64: 32, 32>}, {pipeline_mode = #tpu.pipeline_mode<synchronous>, transform_indices = @transform_4, window_bounds = array<i64: 32, 32>}, {pipeline_mode = #tpu.pipeline_mode<synchronous>, transform_indices = @transform_5, window_bounds = array<i64: 1, 32>}, {pipeline_mode = #tpu.pipeline_mode<synchronous>, transform_indices = @transform_6, window_bounds = array<i64: 1, 32>}, {pipeline_mode = #tpu.pipeline_mode<synchronous>, transform_indices = @transform_7, window_bounds = array<i64: 1, 32>}, {transform_indices = @transform_8, window_bounds = array<i64: 2, 8, 32>}]} {
    %c0 = arith.constant 0 : index
    %c0_0 = arith.constant 0 : index
    %c0_1 = arith.constant 0 : index
    %0 = vector.load %arg1[%c0, %c0_0, %c0_1] : memref<2x8x32xf32, #tpu.memory_space<vmem>>, vector<2x8x32xf32>
    %1 = vector.shape_cast %0 : vector<2x8x32xf32> to vector<16x32xf32>
    %c0_2 = arith.constant 0 : index
    %c0_3 = arith.constant 0 : index
    %2 = vector.load %arg3[%c0_2, %c0_3] : memref<32x32xf32, #tpu.memory_space<vmem>>, vector<32x32xf32>
    %cst = arith.constant dense<0.000000e+00> : vector<16x32xf32>
    %3 = tpu.matmul %1, %2, %cst {dimension_numbers = #tpu.dot_dimension_numbers<[1], [0], [0], [1], [0, 0, 1, 1], [], []>} : vector<16x32xf32>, vector<32x32xf32>, vector<16x32xf32> -> vector<16x32xf32>
    %c0_4 = arith.constant 0 : index
    %c0_5 = arith.constant 0 : index
    %4 = vector.load %arg6[%c0_4, %c0_5] : memref<1x32xf32, #tpu.memory_space<vmem>>, vector<1x32xf32>
    %5 = vector.broadcast %4 : vector<1x32xf32> to vector<16x32xf32>
    %6 = arith.addf %3, %5 : vector<16x32xf32>
    %7 = vector.shape_cast %6 : vector<16x32xf32> to vector<2x8x32xf32>
    %c0_6 = arith.constant 0 : index
    %c0_7 = arith.constant 0 : index
    %8 = vector.load %arg4[%c0_6, %c0_7] : memref<32x32xf32, #tpu.memory_space<vmem>>, vector<32x32xf32>
    %cst_8 = arith.constant dense<0.000000e+00> : vector<16x32xf32>
    %9 = tpu.matmul %1, %8, %cst_8 {dimension_numbers = #tpu.dot_dimension_numbers<[1], [0], [0], [1], [0, 0, 1, 1], [], []>} : vector<16x32xf32>, vector<32x32xf32>, vector<16x32xf32> -> vector<16x32xf32>
    %c0_9 = arith.constant 0 : index
    %c0_10 = arith.constant 0 : index
    %10 = vector.load %arg7[%c0_9, %c0_10] : memref<1x32xf32, #tpu.memory_space<vmem>>, vector<1x32xf32>
    %11 = vector.broadcast %10 : vector<1x32xf32> to vector<16x32xf32>
    %12 = arith.addf %9, %11 : vector<16x32xf32>
    %13 = vector.shape_cast %12 : vector<16x32xf32> to vector<2x8x32xf32>
    %c0_11 = arith.constant 0 : index
    %c0_12 = arith.constant 0 : index
    %14 = vector.load %arg5[%c0_11, %c0_12] : memref<32x32xf32, #tpu.memory_space<vmem>>, vector<32x32xf32>
    %cst_13 = arith.constant dense<0.000000e+00> : vector<16x32xf32>
    %15 = tpu.matmul %1, %14, %cst_13 {dimension_numbers = #tpu.dot_dimension_numbers<[1], [0], [0], [1], [0, 0, 1, 1], [], []>} : vector<16x32xf32>, vector<32x32xf32>, vector<16x32xf32> -> vector<16x32xf32>
    %c0_14 = arith.constant 0 : index
    %c0_15 = arith.constant 0 : index
    %16 = vector.load %arg8[%c0_14, %c0_15] : memref<1x32xf32, #tpu.memory_space<vmem>>, vector<1x32xf32>
    %17 = vector.broadcast %16 : vector<1x32xf32> to vector<16x32xf32>
    %18 = arith.addf %15, %17 : vector<16x32xf32>
    %19 = vector.shape_cast %18 : vector<16x32xf32> to vector<2x8x32xf32>
    "tpu.trace_start"() <{level = 10 : i32, message = "bqd,bkd->bqk"}> : () -> ()
    %cst_16 = arith.constant dense<0.000000e+00> : vector<2x8x8xf32>
    %20 = tpu.matmul %7, %13, %cst_16 {dimension_numbers = #tpu.dot_dimension_numbers<[2], [2], [1], [1], [0, 0, 0, 1, 1, 1], [0], [0]>} : vector<2x8x32xf32>, vector<2x8x32xf32>, vector<2x8x8xf32> -> vector<2x8x8xf32>
    "tpu.trace_stop"() : () -> ()
    %cst_17 = arith.constant 0.176776692 : f32
    %21 = vector.broadcast %cst_17 : f32 to vector<2x8x8xf32>
    %22 = arith.mulf %20, %21 : vector<2x8x8xf32>
    %c0_18 = arith.constant 0 : index
    %c0_19 = arith.constant 0 : index
    %c0_20 = arith.constant 0 : index
    %23 = vector.load %arg2[%c0_18, %c0_19, %c0_20] : memref<2x8x8xi32, #tpu.memory_space<vmem>>, vector<2x8x8xi32>
    %c429496729_i32 = arith.constant 429496729 : i32
    %24 = vector.broadcast %c429496729_i32 : i32 to vector<2x8x8xi32>
    %25 = arith.cmpi ult, %23, %24 : vector<2x8x8xi32>
    %cst_21 = arith.constant 0xFF800000 : f32
    %26 = vector.broadcast %cst_21 : f32 to vector<2x8x8xf32>
    %27 = arith.select %25, %26, %22 : vector<2x8x8xi1>, vector<2x8x8xf32>
    %cst_22 = arith.constant dense<0xFF800000> : vector<2x8xf32>
    %28 = vector.multi_reduction <maximumf>, %27, %cst_22 [2] : vector<2x8x8xf32> to vector<2x8xf32>
    %29 = vector.shape_cast %28 : vector<2x8xf32> to vector<2x8x1xf32>
    %30 = vector.broadcast %29 : vector<2x8x1xf32> to vector<2x8x8xf32>
    %31 = arith.subf %27, %30 : vector<2x8x8xf32>
    %32 = math.exp %31 : vector<2x8x8xf32>
    %cst_23 = arith.constant dense<0.000000e+00> : vector<2x8xf32>
    %33 = vector.multi_reduction <add>, %32, %cst_23 [2] : vector<2x8x8xf32> to vector<2x8xf32>
    %34 = vector.shape_cast %33 : vector<2x8xf32> to vector<2x8x1xf32>
    %35 = vector.broadcast %34 : vector<2x8x1xf32> to vector<2x8x8xf32>
    %36 = arith.divf %32, %35 : vector<2x8x8xf32>
    "tpu.trace_start"() <{level = 10 : i32, message = "bqk,bkd->bqd"}> : () -> ()
    %cst_24 = arith.constant dense<0.000000e+00> : vector<2x8x32xf32>
    %37 = tpu.matmul %36, %19, %cst_24 {dimension_numbers = #tpu.dot_dimension_numbers<[2], [1], [1], [2], [0, 0, 0, 1, 1, 2], [0], [0]>} : vector<2x8x8xf32>, vector<2x8x32xf32>, vector<2x8x32xf32> -> vector<2x8x32xf32>
    "tpu.trace_stop"() : () -> ()
    %c0_25 = arith.constant 0 : index
    %c0_26 = arith.constant 0 : index
    %c0_27 = arith.constant 0 : index
    %38 = vector.load %arg9[%c0_25, %c0_26, %c0_27] : memref<2x8x32xf32, #tpu.memory_space<vmem>>, vector<2x8x32xf32>
    tpu.vector_store %arg9[%c0_25, %c0_26, %c0_27], %37 {strides = array<i32>} : memref<2x8x32xf32, #tpu.memory_space<vmem>>, vector<2x8x32xf32>,
    return
  }
  func.func @transform_0(%arg0: i32) -> (i32, i32, i32) {
    %c0_i32 = arith.constant 0 : i32
    %c0_i32_0 = arith.constant 0 : i32
    %c0_i32_1 = arith.constant 0 : i32
    return %arg0, %c0_i32, %c0_i32_0 : i32, i32, i32
  }
  func.func @transform_1(%arg0: i32) -> (i32, i32, i32) {
    %c0_i32 = arith.constant 0 : i32
    %c0_i32_0 = arith.constant 0 : i32
    %c0_i32_1 = arith.constant 0 : i32
    return %arg0, %c0_i32, %c0_i32_0 : i32, i32, i32
  }
  func.func @transform_2(%arg0: i32) -> (i32, i32) {
    %c0_i32 = arith.constant 0 : i32
    %c0_i32_0 = arith.constant 0 : i32
    %c0_i32_1 = arith.constant 0 : i32
    return %c0_i32, %c0_i32_0 : i32, i32
  }
  func.func @transform_3(%arg0: i32) -> (i32, i32) {
    %c0_i32 = arith.constant 0 : i32
    %c0_i32_0 = arith.constant 0 : i32
    %c0_i32_1 = arith.constant 0 : i32
    return %c0_i32, %c0_i32_0 : i32, i32
  }
  func.func @transform_4(%arg0: i32) -> (i32, i32) {
    %c0_i32 = arith.constant 0 : i32
    %c0_i32_0 = arith.constant 0 : i32
    %c0_i32_1 = arith.constant 0 : i32
    return %c0_i32, %c0_i32_0 : i32, i32
  }
  func.func @transform_5(%arg0: i32) -> (i32, i32) {
    %c0_i32 = arith.constant 0 : i32
    %c0_i32_0 = arith.constant 0 : i32
    %c0_i32_1 = arith.constant 0 : i32
    return %c0_i32, %c0_i32_0 : i32, i32
  }
  func.func @transform_6(%arg0: i32) -> (i32, i32) {
    %c0_i32 = arith.constant 0 : i32
    %c0_i32_0 = arith.constant 0 : i32
    %c0_i32_1 = arith.constant 0 : i32
    return %c0_i32, %c0_i32_0 : i32, i32
  }
  func.func @transform_7(%arg0: i32) -> (i32, i32) {
    %c0_i32 = arith.constant 0 : i32
    %c0_i32_0 = arith.constant 0 : i32
    %c0_i32_1 = arith.constant 0 : i32
    return %c0_i32, %c0_i32_0 : i32, i32
  }
  func.func @transform_8(%arg0: i32) -> (i32, i32, i32) {
    %c0_i32 = arith.constant 0 : i32
    %c0_i32_0 = arith.constant 0 : i32
    %c0_i32_1 = arith.constant 0 : i32
    return %arg0, %c0_i32, %c0_i32_0 : i32, i32, i32
  }
}

</mosaic_0001>

<llo_original>
// kernel: tpu_custom_call.1
$region0: #{tpu_custom_call.1}
  #allocation0 [shape = 'u32[]', space=smem, size = 0x4, offset = 0x4, fixed_abs, tag = 'smem constant byte address 0x4 - core index']
  #allocation1 [shape = 'u32[144,128]{1,0:T(1,128)}', space=vmem, size = 0x12000, scoped, tag = 'internal scratch']
  %s0 = inlined_call_operand.hbm [shape: f32[2,8,32], index: 0, kind: input, shape index: {}]
  %s1 = inlined_call_operand.hbm [shape: u32[2,8,8], index: 1, kind: input, shape index: {}]
  %s2 = inlined_call_operand.hbm [shape: f32[32,32], index: 2, kind: input, shape index: {}]
  %s3 = inlined_call_operand.hbm [shape: f32[32,32], index: 3, kind: input, shape index: {}]
  %s4 = inlined_call_operand.hbm [shape: f32[32,32], index: 4, kind: input, shape index: {}]
  %s5 = inlined_call_operand.vmem [shape: f32[1,32], index: 5, kind: input, shape index: {}]
  %s6 = inlined_call_operand.vmem [shape: f32[1,32], index: 6, kind: input, shape index: {}]
  %s7 = inlined_call_operand.vmem [shape: f32[1,32], index: 7, kind: input, shape index: {}]
  %s8 = inlined_call_operand.hbm [shape: f32[2,8,32], index: 8, kind: output, shape index: {}]
  %s9 = sld [smem:[#allocation0]]
  $region62: #{tpu_custom_call.1} parent=0
    _
  %s11 = ssub.s32 1, %s9
  %s12 = scalar_select 0, %s11, %s9
  $region1: #{tpu_custom_call.1} parent=0
    #allocation2 [shape = 'u8[8192]{0}', space=vmem, size = 0x2000, scoped, tag = 'input window, operand 0, single buffered']
    #allocation3 [shape = 's32[1]{0}', space=sflag, size = 0x4, scoped, tag = 'scoped memory for tpu_custom_call.1']
    #allocation4 [shape = 's32[1]{0}', space=sflag, size = 0x4, scoped, tag = 'scoped memory for tpu_custom_call.1']
    #allocation5 [shape = 'u8[8192]{0}', space=vmem, size = 0x2000, scoped, tag = 'input window, operand 1, single buffered']
    #allocation6 [shape = 's32[1]{0}', space=sflag, size = 0x4, scoped, tag = 'scoped memory for tpu_custom_call.1']
    #allocation7 [shape = 'u8[16384]{0}', space=vmem, size = 0x4000, scoped, tag = 'input window, operand 2, single buffered']
    #allocation8 [shape = 'u8[16384]{0}', space=vmem, size = 0x4000, scoped, tag = 'input window, operand 3, single buffered']
    #allocation9 [shape = 's32[1]{0}', space=sflag, size = 0x4, scoped, tag = 'scoped memory for tpu_custom_call.1']
    #allocation10 [shape = 'u8[16384]{0}', space=vmem, size = 0x4000, scoped, tag = 'input window, operand 4, single buffered']
    #allocation11 [shape = 'u8[8192]{0}', space=vmem, size = 0x2000, scoped, tag = 'output window, operand 0, single buffered']
    %13 = vsyncpa [#allocation3], 0
    %14 = vsyncpa [#allocation6], 0
    %15 = vsyncpa [#allocation9], 0
    %16 = vsyncpa [#allocation4], 0
    // Predicated region
    $region2: #{tpu_custom_call.1} parent=1 // pred_check
      _
    $region3: #{tpu_custom_call.1} parent=1 // pred_check_branch
      %18 = sbr.rel (0) target = $region5
    $region4: #{tpu_custom_call.1} parent=1 // pred_region
      %s20 = ssub.s32 256, 256
      %21 = vsyncadd [#allocation3], %s20
      %s22 = sshll.u32 [#allocation2], 4
      %s23 = int_to_ptr.vmem [resolvable:$true] %s22
      %28 = dma.hbm_to_vmem [thread:$0]  %s0, 256, %s23, [#allocation3], 128, 128, 8
    $region5: #{tpu_custom_call.1} parent=1 // pred_fallthru
      _
    // Predicated region
    $region6: #{tpu_custom_call.1} parent=1 // pred_check
      _
    $region7: #{tpu_custom_call.1} parent=1 // pred_check_branch
      %30 = sbr.rel (0) target = $region9
    $region8: #{tpu_custom_call.1} parent=1 // pred_region
      %s32 = ssub.s32 256, 256
      %33 = vsyncadd [#allocation6], %s32
      %s34 = sshll.u32 [#allocation5], 4
      %s35 = int_to_ptr.vmem [resolvable:$true] %s34
      %40 = dma.hbm_to_vmem [thread:$0]  %s1, 256, %s35, [#allocation6], 128, 128, 8
    $region9: #{tpu_custom_call.1} parent=1 // pred_fallthru
      _
    // Predicated region
    $region10: #{tpu_custom_call.1} parent=1 // pred_check
      _
    $region11: #{tpu_custom_call.1} parent=1 // pred_check_branch
      %42 = sbr.rel (0) target = $region13
    $region12: #{tpu_custom_call.1} parent=1 // pred_region
      %s44 = ssub.s32 512, 512
      %45 = vsyncadd [#allocation6], %s44
      %s46 = sshll.u32 [#allocation7], 4
      %s47 = int_to_ptr.vmem [resolvable:$true] %s46
      %52 = dma.hbm_to_vmem [thread:$0]  %s2, 512, %s47, [#allocation6], 128, 128, 8
    $region13: #{tpu_custom_call.1} parent=1 // pred_fallthru
      _
    // Predicated region
    $region14: #{tpu_custom_call.1} parent=1 // pred_check
      _
    $region15: #{tpu_custom_call.1} parent=1 // pred_check_branch
      %54 = sbr.rel (0) target = $region17
    $region16: #{tpu_custom_call.1} parent=1 // pred_region
      %s56 = ssub.s32 512, 512
      %57 = vsyncadd [#allocation9], %s56
      %s58 = sshll.u32 [#allocation8], 4
      %s59 = int_to_ptr.vmem [resolvable:$true] %s58
      %64 = dma.hbm_to_vmem [thread:$0]  %s3, 512, %s59, [#allocation9], 128, 128, 8
    $region17: #{tpu_custom_call.1} parent=1 // pred_fallthru
      _
    // Predicated region
    $region18: #{tpu_custom_call.1} parent=1 // pred_check
      _
    $region19: #{tpu_custom_call.1} parent=1 // pred_check_branch
      %66 = sbr.rel (0) target = $region21
    $region20: #{tpu_custom_call.1} parent=1 // pred_region
      %s68 = ssub.s32 512, 512
      %69 = vsyncadd [#allocation9], %s68
      %s70 = sshll.u32 [#allocation10], 4
      %s71 = int_to_ptr.vmem [resolvable:$true] %s70
      %76 = dma.hbm_to_vmem [thread:$0]  %s4, 512, %s71, [#allocation9], 128, 128, 8
    $region21: #{tpu_custom_call.1} parent=1 // pred_fallthru
      _
    // Predicated region
    $region22: #{tpu_custom_call.1} parent=1 // pred_check
      _
    $region23: #{tpu_custom_call.1} parent=1 // pred_check_branch
      %78 = sbr.rel (0) target = $region25
    $region24: #{tpu_custom_call.1} parent=1 // pred_region
      _
    $region25: #{tpu_custom_call.1} parent=1 // pred_fallthru
      _
    // Predicated region
    $region26: #{tpu_custom_call.1} parent=1 // pred_check
      _
    $region27: #{tpu_custom_call.1} parent=1 // pred_check_branch
      %80 = sbr.rel (0) target = $region29
    $region28: #{tpu_custom_call.1} parent=1 // pred_region
      _
    $region29: #{tpu_custom_call.1} parent=1 // pred_fallthru
      _
    // Predicated region
    $region30: #{tpu_custom_call.1} parent=1 // pred_check
      _
    $region31: #{tpu_custom_call.1} parent=1 // pred_check_branch
      %82 = sbr.rel (0) target = $region33
    $region32: #{tpu_custom_call.1} parent=1 // pred_region
      _
    $region33: #{tpu_custom_call.1} parent=1 // pred_fallthru
      _
    // Predicated region
    $region34: #{tpu_custom_call.1} parent=1 // pred_check
      _
    $region35: #{tpu_custom_call.1} parent=1 // pred_check_branch
      %84 = sbr.rel (0) target = $region37
    $region36: #{tpu_custom_call.1} parent=1 // pred_region
      %85 = dma.done [#allocation3], 256
    $region37: #{tpu_custom_call.1} parent=1 // pred_fallthru
      _
    // Predicated region
    $region38: #{tpu_custom_call.1} parent=1 // pred_check
      _
    $region39: #{tpu_custom_call.1} parent=1 // pred_check_branch
      %87 = sbr.rel (0) target = $region41
    $region40: #{tpu_custom_call.1} parent=1 // pred_region
      %88 = dma.done [#allocation6], 256
    $region41: #{tpu_custom_call.1} parent=1 // pred_fallthru
      _
    // Predicated region
    $region42: #{tpu_custom_call.1} parent=1 // pred_check
      _
    $region43: #{tpu_custom_call.1} parent=1 // pred_check_branch
      %90 = sbr.rel (0) target = $region45
    $region44: #{tpu_custom_call.1} parent=1 // pred_region
      %91 = dma.done [#allocation6], 512
    $region45: #{tpu_custom_call.1} parent=1 // pred_fallthru
      _
    // Predicated region
    $region46: #{tpu_custom_call.1} parent=1 // pred_check
      _
    $region47: #{tpu_custom_call.1} parent=1 // pred_check_branch
      %93 = sbr.rel (0) target = $region49
    $region48: #{tpu_custom_call.1} parent=1 // pred_region
      %94 = dma.done [#allocation9], 512
    $region49: #{tpu_custom_call.1} parent=1 // pred_fallthru
      _
    // Predicated region
    $region50: #{tpu_custom_call.1} parent=1 // pred_check
      _
    $region51: #{tpu_custom_call.1} parent=1 // pred_check_branch
      %96 = sbr.rel (0) target = $region53
    $region52: #{tpu_custom_call.1} parent=1 // pred_region
      %97 = dma.done [#allocation9], 512
    $region53: #{tpu_custom_call.1} parent=1 // pred_fallthru
      _
    %v98 = vld [vmem:[#allocation2] sm:$0xff]
    %v99 = vld [vmem:[#allocation2 + $0x8] sm:$0xff]
    %v100 = vld [vmem:[#allocation7] sm:$0xff]
    %v101 = vld [vmem:[#allocation7 + $0x8] sm:$0xff]
    %v102 = vld [vmem:[#allocation7 + $0x10] sm:$0xff]
    %v103 = vld [vmem:[#allocation7 + $0x18] sm:$0xff]
    %v104 = vld [vmem:[%s5] sm:$0x1]
    %v106 = vlaneseq
    %v107 = vshrl.u32 %v106, 7
    %v108 = vsub.s32 0, %v107
    %v109 = vrot.slane %v104, %v108
    %vm111 = vcmask 261120
    %v113 = vsel %vm111, %v98, 0
    %v116 = vsel %vm111, %v99, 0
    %118 = vmatprep.subr.mxu0 0.0
    %119 = vmatpush1.msra.mxu0 0.0
    %120 = vmatprep.subr.mxu0 0.0
    %121 = vmatpush1.msra.mxu0 0.0
    %122 = vmatprep.subr.mxu0 0.0
    %123 = vmatpush1.msra.mxu0 0.0
    %124 = vmatprep.subr.mxu0 0.0
    %125 = vmatpush1.msra.mxu0 0.0
    %126 = vmatprep.subr.mxu0 0.0
    %127 = vmatpush1.msra.mxu0 0.0
    %128 = vmatprep.subr.mxu0 0.0
    %129 = vmatpush1.msra.mxu0 0.0
    %130 = vmatprep.subr.mxu0 0.0
    %131 = vmatpush1.msra.mxu0 0.0
    %132 = vmatprep.subr.mxu0 0.0
    %133 = vmatpush1.msra.mxu0 0.0
    %134 = vmatprep.subr.mxu0 0.0
    %135 = vmatpush1.msra.mxu0 0.0
    %136 = vmatprep.subr.mxu0 0.0
    %137 = vmatpush1.msra.mxu0 0.0
    %138 = vmatprep.subr.mxu0 0.0
    %139 = vmatpush1.msra.mxu0 0.0
    %140 = vmatprep.subr.mxu0 0.0
    %141 = vmatpush1.msra.mxu0 0.0
    %142 = vmatprep.subr.mxu0 0.0
    %143 = vmatpush1.msra.mxu0 %v103
    %144 = vmatprep.subr.mxu0 0.0
    %145 = vmatpush1.msra.mxu0 %v102
    %146 = vmatprep.subr.mxu0 0.0
    %147 = vmatpush1.msra.mxu0 %v101
    %148 = vmatprep.subr.mxu0 0.0
    %149 = vmatpush1.msra.mxu0 %v100
    %150 = vmatprep.subr.mxu0 0.0
    %151 = vmatpush2.msra.mxu0 0.0
    %152 = vmatprep.subr.mxu0 0.0
    %153 = vmatpush2.msra.mxu0 0.0
    %154 = vmatprep.subr.mxu0 0.0
    %155 = vmatpush2.msra.mxu0 0.0
    %156 = vmatprep.subr.mxu0 0.0
    %157 = vmatpush2.msra.mxu0 0.0
    %158 = vmatprep.subr.mxu0 0.0
    %159 = vmatpush2.msra.mxu0 0.0
    %160 = vmatprep.subr.mxu0 0.0
    %161 = vmatpush2.msra.mxu0 0.0
    %162 = vmatprep.subr.mxu0 0.0
    %163 = vmatpush2.msra.mxu0 0.0
    %164 = vmatprep.subr.mxu0 0.0
    %165 = vmatpush2.msra.mxu0 0.0
    %166 = vmatprep.subr.mxu0 0.0
    %167 = vmatpush2.msra.mxu0 0.0
    %168 = vmatprep.subr.mxu0 0.0
    %169 = vmatpush2.msra.mxu0 0.0
    %170 = vmatprep.subr.mxu0 0.0
    %171 = vmatpush2.msra.mxu0 0.0
    %172 = vmatprep.subr.mxu0 0.0
    %173 = vmatpush2.msra.mxu0 0.0
    %174 = vmatprep.subr.mxu0 0.0
    %175 = vmatpush2.msra.mxu0 0.0
    %176 = vmatprep.subr.mxu0 0.0
    %177 = vmatpush2.msra.mxu0 0.0
    %178 = vmatprep.subr.mxu0 0.0
    %179 = vmatpush2.msra.mxu0 0.0
    %180 = vmatprep.subr.mxu0 0.0
    %181 = vmatpush2.msra.mxu0 0.0
    %182 = vmatprep.mubr.f32.mxu0 0.0
    %183 = vmatmul.mubr.f32.gmra.mxu0 %v113
    %v184 = vpop.f32.mrf.mxu0
    %v185 = vadd.f32 %v109, %v184
    %v186 = vpop.f32.mrf.mxu0
    %187 = vmatprep.mubr.f32.mxu0 0.0
    %188 = vmatmul.mubr.f32.gmra.mxu0 %v116
    %v189 = vpop.f32.mrf.mxu0
    %v190 = vadd.f32 %v109, %v189
    %v191 = vpop.f32.mrf.mxu0
    %192 = vdwg.mxu0
    %v193 = vld [vmem:[#allocation8] sm:$0xff]
    %v194 = vld [vmem:[#allocation8 + $0x8] sm:$0xff]
    %v195 = vld [vmem:[#allocation8 + $0x10] sm:$0xff]
    %v196 = vld [vmem:[#allocation8 + $0x18] sm:$0xff]
    %v197 = vld [vmem:[%s6] sm:$0x1]
    %v199 = vlaneseq
    %v200 = vshrl.u32 %v199, 7
    %v201 = vsub.s32 0, %v200
    %v202 = vrot.slane %v197, %v201
    %204 = vmatprep.subr.mxu0 0.0
    %205 = vmatpush1.msra.mxu0 0.0
    %206 = vmatprep.subr.mxu0 0.0
    %207 = vmatpush1.msra.mxu0 0.0
    %208 = vmatprep.subr.mxu0 0.0
    %209 = vmatpush1.msra.mxu0 0.0
    %210 = vmatprep.subr.mxu0 0.0
    %211 = vmatpush1.msra.mxu0 0.0
    %212 = vmatprep.subr.mxu0 0.0
    %213 = vmatpush1.msra.mxu0 0.0
    %214 = vmatprep.subr.mxu0 0.0
    %215 = vmatpush1.msra.mxu0 0.0
    %216 = vmatprep.subr.mxu0 0.0
    %217 = vmatpush1.msra.mxu0 0.0
    %218 = vmatprep.subr.mxu0 0.0
    %219 = vmatpush1.msra.mxu0 0.0
    %220 = vmatprep.subr.mxu0 0.0
    %221 = vmatpush1.msra.mxu0 0.0
    %222 = vmatprep.subr.mxu0 0.0
    %223 = vmatpush1.msra.mxu0 0.0
    %224 = vmatprep.subr.mxu0 0.0
    %225 = vmatpush1.msra.mxu0 0.0
    %226 = vmatprep.subr.mxu0 0.0
    %227 = vmatpush1.msra.mxu0 0.0
    %228 = vmatprep.subr.mxu0 0.0
    %229 = vmatpush1.msra.mxu0 %v196
    %230 = vmatprep.subr.mxu0 0.0
    %231 = vmatpush1.msra.mxu0 %v195
    %232 = vmatprep.subr.mxu0 0.0
    %233 = vmatpush1.msra.mxu0 %v194
    %234 = vmatprep.subr.mxu0 0.0
    %235 = vmatpush1.msra.mxu0 %v193
    %236 = vmatprep.subr.mxu0 0.0
    %237 = vmatpush2.msra.mxu0 0.0
    %238 = vmatprep.subr.mxu0 0.0
    %239 = vmatpush2.msra.mxu0 0.0
    %240 = vmatprep.subr.mxu0 0.0
    %241 = vmatpush2.msra.mxu0 0.0
    %242 = vmatprep.subr.mxu0 0.0
    %243 = vmatpush2.msra.mxu0 0.0
    %244 = vmatprep.subr.mxu0 0.0
    %245 = vmatpush2.msra.mxu0 0.0
    %246 = vmatprep.subr.mxu0 0.0
    %247 = vmatpush2.msra.mxu0 0.0
    %248 = vmatprep.subr.mxu0 0.0
    %249 = vmatpush2.msra.mxu0 0.0
    %250 = vmatprep.subr.mxu0 0.0
    %251 = vmatpush2.msra.mxu0 0.0
    %252 = vmatprep.subr.mxu0 0.0
    %253 = vmatpush2.msra.mxu0 0.0
    %254 = vmatprep.subr.mxu0 0.0
    %255 = vmatpush2.msra.mxu0 0.0
    %256 = vmatprep.subr.mxu0 0.0
    %257 = vmatpush2.msra.mxu0 0.0
    %258 = vmatprep.subr.mxu0 0.0
    %259 = vmatpush2.msra.mxu0 0.0
    %260 = vmatprep.subr.mxu0 0.0
    %261 = vmatpush2.msra.mxu0 0.0
    %262 = vmatprep.subr.mxu0 0.0
    %263 = vmatpush2.msra.mxu0 0.0
    %264 = vmatprep.subr.mxu0 0.0
    %265 = vmatpush2.msra.mxu0 0.0
    %266 = vmatprep.subr.mxu0 0.0
    %267 = vmatpush2.msra.mxu0 0.0
    %268 = vmatprep.mubr.f32.mxu0 0.0
    %269 = vmatmul.mubr.f32.gmra.mxu0 %v113
    %v270 = vpop.f32.mrf.mxu0
    %v271 = vadd.f32 %v202, %v270
    %v272 = vpop.f32.mrf.mxu0
    %273 = vmatprep.mubr.f32.mxu0 0.0
    %274 = vmatmul.mubr.f32.gmra.mxu0 %v116
    %v275 = vpop.f32.mrf.mxu0
    %v276 = vadd.f32 %v202, %v275
    %v277 = vpop.f32.mrf.mxu0
    %278 = vdwg.mxu0
    %v279 = vld [vmem:[#allocation10] sm:$0xff]
    %v280 = vld [vmem:[#allocation10 + $0x8] sm:$0xff]
    %v281 = vld [vmem:[#allocation10 + $0x10] sm:$0xff]
    %v282 = vld [vmem:[#allocation10 + $0x18] sm:$0xff]
    %v283 = vld [vmem:[%s7] sm:$0x1]
    %v285 = vlaneseq
    %v286 = vshrl.u32 %v285, 7
    %v287 = vsub.s32 0, %v286
    %v288 = vrot.slane %v283, %v287
    %290 = vmatprep.subr.mxu0 0.0
    %291 = vmatpush1.msra.mxu0 0.0
    %292 = vmatprep.subr.mxu0 0.0
    %293 = vmatpush1.msra.mxu0 0.0
    %294 = vmatprep.subr.mxu0 0.0
    %295 = vmatpush1.msra.mxu0 0.0
    %296 = vmatprep.subr.mxu0 0.0
    %297 = vmatpush1.msra.mxu0 0.0
    %298 = vmatprep.subr.mxu0 0.0
    %299 = vmatpush1.msra.mxu0 0.0
    %300 = vmatprep.subr.mxu0 0.0
    %301 = vmatpush1.msra.mxu0 0.0
    %302 = vmatprep.subr.mxu0 0.0
    %303 = vmatpush1.msra.mxu0 0.0
    %304 = vmatprep.subr.mxu0 0.0
    %305 = vmatpush1.msra.mxu0 0.0
    %306 = vmatprep.subr.mxu0 0.0
    %307 = vmatpush1.msra.mxu0 0.0
    %308 = vmatprep.subr.mxu0 0.0
    %309 = vmatpush1.msra.mxu0 0.0
    %310 = vmatprep.subr.mxu0 0.0
    %311 = vmatpush1.msra.mxu0 0.0
    %312 = vmatprep.subr.mxu0 0.0
    %313 = vmatpush1.msra.mxu0 0.0
    %314 = vmatprep.subr.mxu0 0.0
    %315 = vmatpush1.msra.mxu0 %v282
    %316 = vmatprep.subr.mxu0 0.0
    %317 = vmatpush1.msra.mxu0 %v281
    %318 = vmatprep.subr.mxu0 0.0
    %319 = vmatpush1.msra.mxu0 %v280
    %320 = vmatprep.subr.mxu0 0.0
    %321 = vmatpush1.msra.mxu0 %v279
    %322 = vmatprep.subr.mxu0 0.0
    %323 = vmatpush2.msra.mxu0 0.0
    %324 = vmatprep.subr.mxu0 0.0
    %325 = vmatpush2.msra.mxu0 0.0
    %326 = vmatprep.subr.mxu0 0.0
    %327 = vmatpush2.msra.mxu0 0.0
    %328 = vmatprep.subr.mxu0 0.0
    %329 = vmatpush2.msra.mxu0 0.0
    %330 = vmatprep.subr.mxu0 0.0
    %331 = vmatpush2.msra.mxu0 0.0
    %332 = vmatprep.subr.mxu0 0.0
    %333 = vmatpush2.msra.mxu0 0.0
    %334 = vmatprep.subr.mxu0 0.0
    %335 = vmatpush2.msra.mxu0 0.0
    %336 = vmatprep.subr.mxu0 0.0
    %337 = vmatpush2.msra.mxu0 0.0
    %338 = vmatprep.subr.mxu0 0.0
    %339 = vmatpush2.msra.mxu0 0.0
    %340 = vmatprep.subr.mxu0 0.0
    %341 = vmatpush2.msra.mxu0 0.0
    %342 = vmatprep.subr.mxu0 0.0
    %343 = vmatpush2.msra.mxu0 0.0
    %344 = vmatprep.subr.mxu0 0.0
    %345 = vmatpush2.msra.mxu0 0.0
    %346 = vmatprep.subr.mxu0 0.0
    %347 = vmatpush2.msra.mxu0 0.0
    %348 = vmatprep.subr.mxu0 0.0
    %349 = vmatpush2.msra.mxu0 0.0
    %350 = vmatprep.subr.mxu0 0.0
    %351 = vmatpush2.msra.mxu0 0.0
    %352 = vmatprep.subr.mxu0 0.0
    %353 = vmatpush2.msra.mxu0 0.0
    %354 = vmatprep.mubr.f32.mxu0 0.0
    %355 = vmatmul.mubr.f32.gmra.mxu0 %v113
    %v356 = vpop.f32.mrf.mxu0
    %v357 = vadd.f32 %v288, %v356
    %v358 = vpop.f32.mrf.mxu0
    %359 = vmatprep.mubr.f32.mxu0 0.0
    %360 = vmatmul.mubr.f32.gmra.mxu0 %v116
    %v361 = vpop.f32.mrf.mxu0
    %v362 = vadd.f32 %v288, %v361
    %v363 = vpop.f32.mrf.mxu0
    %364 = vdwg.mxu0
    %v366 = vsel %vm111, %v185, 0
    %v369 = vsel %vm111, %v271, 0
    %371 = vmatprep.subr.mxu0 0.0
    %372 = vmatpush1.xpose.msra.mxu0 0.0
    %373 = vmatprep.subr.mxu0 0.0
    %374 = vmatpush1.xpose.msra.mxu0 0.0
    %375 = vmatprep.subr.mxu0 0.0
    %376 = vmatpush1.xpose.msra.mxu0 0.0
    %377 = vmatprep.subr.mxu0 0.0
    %378 = vmatpush1.xpose.msra.mxu0 0.0
    %379 = vmatprep.subr.mxu0 0.0
    %380 = vmatpush1.xpose.msra.mxu0 0.0
    %381 = vmatprep.subr.mxu0 0.0
    %382 = vmatpush1.xpose.msra.mxu0 0.0
    %383 = vmatprep.subr.mxu0 0.0
    %384 = vmatpush1.xpose.msra.mxu0 0.0
    %385 = vmatprep.subr.mxu0 0.0
    %386 = vmatpush1.xpose.msra.mxu0 0.0
    %387 = vmatprep.subr.mxu0 0.0
    %388 = vmatpush1.xpose.msra.mxu0 0.0
    %389 = vmatprep.subr.mxu0 0.0
    %390 = vmatpush1.xpose.msra.mxu0 0.0
    %391 = vmatprep.subr.mxu0 0.0
    %392 = vmatpush1.xpose.msra.mxu0 0.0
    %393 = vmatprep.subr.mxu0 0.0
    %394 = vmatpush1.xpose.msra.mxu0 0.0
    %395 = vmatprep.subr.mxu0 0.0
    %396 = vmatpush1.xpose.msra.mxu0 0.0
    %397 = vmatprep.subr.mxu0 0.0
    %398 = vmatpush1.xpose.msra.mxu0 0.0
    %399 = vmatprep.subr.mxu0 0.0
    %400 = vmatpush1.xpose.msra.mxu0 0.0
    %401 = vmatprep.subr.mxu0 0.0
    %402 = vmatpush1.xpose.msra.mxu0 %v369
    %403 = vmatprep.subr.mxu0 0.0
    %404 = vmatpush2.xpose.msra.mxu0 0.0
    %405 = vmatprep.subr.mxu0 0.0
    %406 = vmatpush2.xpose.msra.mxu0 0.0
    %407 = vmatprep.subr.mxu0 0.0
    %408 = vmatpush2.xpose.msra.mxu0 0.0
    %409 = vmatprep.subr.mxu0 0.0
    %410 = vmatpush2.xpose.msra.mxu0 0.0
    %411 = vmatprep.subr.mxu0 0.0
    %412 = vmatpush2.xpose.msra.mxu0 0.0
    %413 = vmatprep.subr.mxu0 0.0
    %414 = vmatpush2.xpose.msra.mxu0 0.0
    %415 = vmatprep.subr.mxu0 0.0
    %416 = vmatpush2.xpose.msra.mxu0 0.0
    %417 = vmatprep.subr.mxu0 0.0
    %418 = vmatpush2.xpose.msra.mxu0 0.0
    %419 = vmatprep.subr.mxu0 0.0
    %420 = vmatpush2.xpose.msra.mxu0 0.0
    %421 = vmatprep.subr.mxu0 0.0
    %422 = vmatpush2.xpose.msra.mxu0 0.0
    %423 = vmatprep.subr.mxu0 0.0
    %424 = vmatpush2.xpose.msra.mxu0 0.0
    %425 = vmatprep.subr.mxu0 0.0
    %426 = vmatpush2.xpose.msra.mxu0 0.0
    %427 = vmatprep.subr.mxu0 0.0
    %428 = vmatpush2.xpose.msra.mxu0 0.0
    %429 = vmatprep.subr.mxu0 0.0
    %430 = vmatpush2.xpose.msra.mxu0 0.0
    %431 = vmatprep.subr.mxu0 0.0
    %432 = vmatpush2.xpose.msra.mxu0 0.0
    %433 = vmatprep.subr.mxu0 0.0
    %434 = vmatpush2.xpose.msra.mxu0 0.0
    %435 = vmatprep.mubr.f32.mxu0 0.0
    %436 = vmatmul.mubr.f32.gmra.mxu0 %v366
    %v437 = vpop.f32.mrf.mxu0
    %v438 = vadd.f32 0.0, %v437
    %v439 = vpop.f32.mrf.mxu0
    %440 = vdwg.mxu0
    %v442 = vsel %vm111, %v190, 0
    %v445 = vsel %vm111, %v276, 0
    %447 = vmatprep.subr.mxu0 0.0
    %448 = vmatpush1.xpose.msra.mxu0 0.0
    %449 = vmatprep.subr.mxu0 0.0
    %450 = vmatpush1.xpose.msra.mxu0 0.0
    %451 = vmatprep.subr.mxu0 0.0
    %452 = vmatpush1.xpose.msra.mxu0 0.0
    %453 = vmatprep.subr.mxu0 0.0
    %454 = vmatpush1.xpose.msra.mxu0 0.0
    %455 = vmatprep.subr.mxu0 0.0
    %456 = vmatpush1.xpose.msra.mxu0 0.0
    %457 = vmatprep.subr.mxu0 0.0
    %458 = vmatpush1.xpose.msra.mxu0 0.0
    %459 = vmatprep.subr.mxu0 0.0
    %460 = vmatpush1.xpose.msra.mxu0 0.0
    %461 = vmatprep.subr.mxu0 0.0
    %462 = vmatpush1.xpose.msra.mxu0 0.0
    %463 = vmatprep.subr.mxu0 0.0
    %464 = vmatpush1.xpose.msra.mxu0 0.0
    %465 = vmatprep.subr.mxu0 0.0
    %466 = vmatpush1.xpose.msra.mxu0 0.0
    %467 = vmatprep.subr.mxu0 0.0
    %468 = vmatpush1.xpose.msra.mxu0 0.0
    %469 = vmatprep.subr.mxu0 0.0
    %470 = vmatpush1.xpose.msra.mxu0 0.0
    %471 = vmatprep.subr.mxu0 0.0
    %472 = vmatpush1.xpose.msra.mxu0 0.0
    %473 = vmatprep.subr.mxu0 0.0
    %474 = vmatpush1.xpose.msra.mxu0 0.0
    %475 = vmatprep.subr.mxu0 0.0
    %476 = vmatpush1.xpose.msra.mxu0 0.0
    %477 = vmatprep.subr.mxu0 0.0
    %478 = vmatpush1.xpose.msra.mxu0 %v445
    %479 = vmatprep.subr.mxu0 0.0
    %480 = vmatpush2.xpose.msra.mxu0 0.0
    %481 = vmatprep.subr.mxu0 0.0
    %482 = vmatpush2.xpose.msra.mxu0 0.0
    %483 = vmatprep.subr.mxu0 0.0
    %484 = vmatpush2.xpose.msra.mxu0 0.0
    %485 = vmatprep.subr.mxu0 0.0
    %486 = vmatpush2.xpose.msra.mxu0 0.0
    %487 = vmatprep.subr.mxu0 0.0
    %488 = vmatpush2.xpose.msra.mxu0 0.0
    %489 = vmatprep.subr.mxu0 0.0
    %490 = vmatpush2.xpose.msra.mxu0 0.0
    %491 = vmatprep.subr.mxu0 0.0
    %492 = vmatpush2.xpose.msra.mxu0 0.0
    %493 = vmatprep.subr.mxu0 0.0
    %494 = vmatpush2.xpose.msra.mxu0 0.0
    %495 = vmatprep.subr.mxu0 0.0
    %496 = vmatpush2.xpose.msra.mxu0 0.0
    %497 = vmatprep.subr.mxu0 0.0
    %498 = vmatpush2.xpose.msra.mxu0 0.0
    %499 = vmatprep.subr.mxu0 0.0
    %500 = vmatpush2.xpose.msra.mxu0 0.0
    %501 = vmatprep.subr.mxu0 0.0
    %502 = vmatpush2.xpose.msra.mxu0 0.0
    %503 = vmatprep.subr.mxu0 0.0
    %504 = vmatpush2.xpose.msra.mxu0 0.0
    %505 = vmatprep.subr.mxu0 0.0
    %506 = vmatpush2.xpose.msra.mxu0 0.0
    %507 = vmatprep.subr.mxu0 0.0
    %508 = vmatpush2.xpose.msra.mxu0 0.0
    %509 = vmatprep.subr.mxu0 0.0
    %510 = vmatpush2.xpose.msra.mxu0 0.0
    %511 = vmatprep.mubr.f32.mxu0 0.0
    %512 = vmatmul.mubr.f32.gmra.mxu0 %v442
    %v513 = vpop.f32.mrf.mxu0
    %v514 = vadd.f32 0.0, %v513
    %v515 = vpop.f32.mrf.mxu0
    %516 = vdwg.mxu0
    %v517 = vmul.f32 %v438, 0.17677669
    %v518 = vmul.f32 %v514, 0.17677669
    %v519 = vld [vmem:[#allocation5] sm:$0xff]
    %v520 = vld [vmem:[#allocation5 + $0x8] sm:$0xff]
    %vm521 = vcmp.lt.u32.totalorder %v519, 429496729
    %vm522 = vcmp.lt.u32.totalorder %v520, 429496729
    %v523 = vsel %vm521, -inf, %v517
    %v524 = vsel %vm522, -inf, %v518
    %vm525 = vcmask 64512
    %v526 = vsel %vm525, %v523, -inf
    %527 = vmax.xlane.f32.xlu0 %v526
    %v528 = vpop.xlane.xlu0 %527
    %v529 = vsel %vm525, %v524, -inf
    %530 = vmax.xlane.f32.xlu0 %v529
    %v531 = vpop.xlane.xlu0 %530
    %v532 = vsub.f32 %v523, %v528
    %v533 = vsub.f32 %v524, %v531
    %v534 = vmul.f32 %v532, 1.442695
    %v535 = vpow.pop %v534
    %v536 = vmul.f32 %v533, 1.442695
    %v537 = vpow.pop %v536
    %v538 = vsel %vm525, %v535, 0.0
    %539 = vadd.xlane.f32.xlu0 %v538
    %v540 = vpop.xlane.xlu0 %539
    %v541 = vsel %vm525, %v537, 0.0
    %542 = vadd.xlane.f32.xlu0 %v541
    %v543 = vpop.xlane.xlu0 %542
    %v544 = vrcp.pop %v540
    %v545 = vmul.f32 %v535, %v544
    %v546 = vrcp.pop %v543
    %v547 = vmul.f32 %v537, %v546
    %v549 = vsel %vm525, %v545, 0
    %551 = vmatprep.subr.mxu0 0.0
    %552 = vmatpush1.msra.mxu0 0.0
    %553 = vmatprep.subr.mxu0 0.0
    %554 = vmatpush1.msra.mxu0 0.0
    %555 = vmatprep.subr.mxu0 0.0
    %556 = vmatpush1.msra.mxu0 0.0
    %557 = vmatprep.subr.mxu0 0.0
    %558 = vmatpush1.msra.mxu0 0.0
    %559 = vmatprep.subr.mxu0 0.0
    %560 = vmatpush1.msra.mxu0 0.0
    %561 = vmatprep.subr.mxu0 0.0
    %562 = vmatpush1.msra.mxu0 0.0
    %563 = vmatprep.subr.mxu0 0.0
    %564 = vmatpush1.msra.mxu0 0.0
    %565 = vmatprep.subr.mxu0 0.0
    %566 = vmatpush1.msra.mxu0 0.0
    %567 = vmatprep.subr.mxu0 0.0
    %568 = vmatpush1.msra.mxu0 0.0
    %569 = vmatprep.subr.mxu0 0.0
    %570 = vmatpush1.msra.mxu0 0.0
    %571 = vmatprep.subr.mxu0 0.0
    %572 = vmatpush1.msra.mxu0 0.0
    %573 = vmatprep.subr.mxu0 0.0
    %574 = vmatpush1.msra.mxu0 0.0
    %575 = vmatprep.subr.mxu0 0.0
    %576 = vmatpush1.msra.mxu0 0.0
    %577 = vmatprep.subr.mxu0 0.0
    %578 = vmatpush1.msra.mxu0 0.0
    %579 = vmatprep.subr.mxu0 0.0
    %580 = vmatpush1.msra.mxu0 0.0
    %581 = vmatprep.subr.mxu0 0.0
    %582 = vmatpush1.msra.mxu0 %v357
    %583 = vmatprep.subr.mxu0 0.0
    %584 = vmatpush2.msra.mxu0 0.0
    %585 = vmatprep.subr.mxu0 0.0
    %586 = vmatpush2.msra.mxu0 0.0
    %587 = vmatprep.subr.mxu0 0.0
    %588 = vmatpush2.msra.mxu0 0.0
    %589 = vmatprep.subr.mxu0 0.0
    %590 = vmatpush2.msra.mxu0 0.0
    %591 = vmatprep.subr.mxu0 0.0
    %592 = vmatpush2.msra.mxu0 0.0
    %593 = vmatprep.subr.mxu0 0.0
    %594 = vmatpush2.msra.mxu0 0.0
    %595 = vmatprep.subr.mxu0 0.0
    %596 = vmatpush2.msra.mxu0 0.0
    %597 = vmatprep.subr.mxu0 0.0
    %598 = vmatpush2.msra.mxu0 0.0
    %599 = vmatprep.subr.mxu0 0.0
    %600 = vmatpush2.msra.mxu0 0.0
    %601 = vmatprep.subr.mxu0 0.0
    %602 = vmatpush2.msra.mxu0 0.0
    %603 = vmatprep.subr.mxu0 0.0
    %604 = vmatpush2.msra.mxu0 0.0
    %605 = vmatprep.subr.mxu0 0.0
    %606 = vmatpush2.msra.mxu0 0.0
    %607 = vmatprep.subr.mxu0 0.0
    %608 = vmatpush2.msra.mxu0 0.0
    %609 = vmatprep.subr.mxu0 0.0
    %610 = vmatpush2.msra.mxu0 0.0
    %611 = vmatprep.subr.mxu0 0.0
    %612 = vmatpush2.msra.mxu0 0.0
    %613 = vmatprep.subr.mxu0 0.0
    %614 = vmatpush2.msra.mxu0 0.0
    %615 = vmatprep.mubr.f32.mxu0 0.0
    %616 = vmatmul.mubr.f32.gmra.mxu0 %v549
    %v617 = vpop.f32.mrf.mxu0
    %v618 = vadd.f32 0.0, %v617
    %v619 = vpop.f32.mrf.mxu0
    %620 = vdwg.mxu0
    %v622 = vsel %vm525, %v547, 0
    %624 = vmatprep.subr.mxu0 0.0
    %625 = vmatpush1.msra.mxu0 0.0
    %626 = vmatprep.subr.mxu0 0.0
    %627 = vmatpush1.msra.mxu0 0.0
    %628 = vmatprep.subr.mxu0 0.0
    %629 = vmatpush1.msra.mxu0 0.0
    %630 = vmatprep.subr.mxu0 0.0
    %631 = vmatpush1.msra.mxu0 0.0
    %632 = vmatprep.subr.mxu0 0.0
    %633 = vmatpush1.msra.mxu0 0.0
    %634 = vmatprep.subr.mxu0 0.0
    %635 = vmatpush1.msra.mxu0 0.0
    %636 = vmatprep.subr.mxu0 0.0
    %637 = vmatpush1.msra.mxu0 0.0
    %638 = vmatprep.subr.mxu0 0.0
    %639 = vmatpush1.msra.mxu0 0.0
    %640 = vmatprep.subr.mxu0 0.0
    %641 = vmatpush1.msra.mxu0 0.0
    %642 = vmatprep.subr.mxu0 0.0
    %643 = vmatpush1.msra.mxu0 0.0
    %644 = vmatprep.subr.mxu0 0.0
    %645 = vmatpush1.msra.mxu0 0.0
    %646 = vmatprep.subr.mxu0 0.0
    %647 = vmatpush1.msra.mxu0 0.0
    %648 = vmatprep.subr.mxu0 0.0
    %649 = vmatpush1.msra.mxu0 0.0
    %650 = vmatprep.subr.mxu0 0.0
    %651 = vmatpush1.msra.mxu0 0.0
    %652 = vmatprep.subr.mxu0 0.0
    %653 = vmatpush1.msra.mxu0 0.0
    %654 = vmatprep.subr.mxu0 0.0
    %655 = vmatpush1.msra.mxu0 %v362
    %656 = vmatprep.subr.mxu0 0.0
    %657 = vmatpush2.msra.mxu0 0.0
    %658 = vmatprep.subr.mxu0 0.0
    %659 = vmatpush2.msra.mxu0 0.0
    %660 = vmatprep.subr.mxu0 0.0
    %661 = vmatpush2.msra.mxu0 0.0
    %662 = vmatprep.subr.mxu0 0.0
    %663 = vmatpush2.msra.mxu0 0.0
    %664 = vmatprep.subr.mxu0 0.0
    %665 = vmatpush2.msra.mxu0 0.0
    %666 = vmatprep.subr.mxu0 0.0
    %667 = vmatpush2.msra.mxu0 0.0
    %668 = vmatprep.subr.mxu0 0.0
    %669 = vmatpush2.msra.mxu0 0.0
    %670 = vmatprep.subr.mxu0 0.0
    %671 = vmatpush2.msra.mxu0 0.0
    %672 = vmatprep.subr.mxu0 0.0
    %673 = vmatpush2.msra.mxu0 0.0
    %674 = vmatprep.subr.mxu0 0.0
    %675 = vmatpush2.msra.mxu0 0.0
    %676 = vmatprep.subr.mxu0 0.0
    %677 = vmatpush2.msra.mxu0 0.0
    %678 = vmatprep.subr.mxu0 0.0
    %679 = vmatpush2.msra.mxu0 0.0
    %680 = vmatprep.subr.mxu0 0.0
    %681 = vmatpush2.msra.mxu0 0.0
    %682 = vmatprep.subr.mxu0 0.0
    %683 = vmatpush2.msra.mxu0 0.0
    %684 = vmatprep.subr.mxu0 0.0
    %685 = vmatpush2.msra.mxu0 0.0
    %686 = vmatprep.subr.mxu0 0.0
    %687 = vmatpush2.msra.mxu0 0.0
    %688 = vmatprep.mubr.f32.mxu0 0.0
    %689 = vmatmul.mubr.f32.gmra.mxu0 %v622
    %v690 = vpop.f32.mrf.mxu0
    %v691 = vadd.f32 0.0, %v690
    %v692 = vpop.f32.mrf.mxu0
    %693 = vdwg.mxu0
    %694 = vst.msk [vmem:[#allocation11] sm:$0xff] %vm111, %v618
    %695 = vst.msk [vmem:[#allocation11 + $0x8] sm:$0xff] %vm111, %v691
    // Predicated region
    $region54: #{tpu_custom_call.1} parent=1 // pred_check
      _
    $region55: #{tpu_custom_call.1} parent=1 // pred_check_branch
      %697 = sbr.rel (0) target = $region57
    $region56: #{tpu_custom_call.1} parent=1 // pred_region
      %s699 = ssub.s32 256, 256
      %700 = vsyncadd [#allocation4], %s699
      %s701 = sshll.u32 [#allocation11], 4
      %s702 = int_to_ptr.vmem [resolvable:$true] %s701
      %707 = dma.vmem_to_hbm [thread:$0]  %s702, 256, %s8, [#allocation4], 128, 128, 8
    $region57: #{tpu_custom_call.1} parent=1 // pred_fallthru
      _
    // Predicated region
    $region58: #{tpu_custom_call.1} parent=1 // pred_check
      _
    $region59: #{tpu_custom_call.1} parent=1 // pred_check_branch
      %709 = sbr.rel (0) target = $region61
    $region60: #{tpu_custom_call.1} parent=1 // pred_region
      %710 = dma.done [#allocation4], 256
    $region61: #{tpu_custom_call.1} parent=1 // pred_fallthru
      _
    %711 = vsyncpa [#allocation3], 1
    %712 = vsyncpa [#allocation6], 1
    %713 = vsyncpa [#allocation9], 1
    %714 = vsyncpa [#allocation4], 1

</llo_original>
